<compile_context>
chip_gen: v7x
topology: tpu7x:2x2x1
jax: 0.10.0
libtpu: 0.0.40
codegen_flags: <defaults>
</compile_context>

<pallas_src>
import functools

import jax
import jax.numpy as jnp
from jax.experimental import pallas as pl
from jax.experimental.pallas import tpu as pltpu

_LANES = 128
_MAX_ROW_TILE = 2048          # 2048 x 128 x 4B = 1 MiB per f32 block


def _round_up(x, m):
    return ((x + m - 1) // m) * m


def _pick_row_tile(r8):
    """Pick a sublane tile TM (multiple of 8) with small row-padding waste."""
    if r8 <= _MAX_ROW_TILE:
        return r8                                    # single row tile, no waste
    for tm in (2048, 1024, 512, 256, 128, 64, 32, 16, 8):
        if (_round_up(r8, tm) - r8) * 20 <= r8:      # <= ~5% padded rows
            return tm
    return 8


def _make_kernel(scaler_type):
    def kernel(param_ref, bias_ref, dist_ref, out_ref, *scratch):
        h = pl.program_id(2)

        if scaler_type == "Linear":
            p = jnp.maximum(param_ref[h], 1e-6)
            b = jnp.maximum(bias_ref[h], 1e-6)
            out_ref[...] = (p * dist_ref[...] + b).astype(out_ref.dtype)
            return

        log_ref = scratch[0]

        if scaler_type in ("Log", "Log_NON_LEARNABLE"):
            @pl.when(h == 0)
            def _():
                log_ref[...] = jnp.log(dist_ref[...].astype(jnp.float32) + 1.0)

            if scaler_type == "Log":
                p = jnp.maximum(param_ref[h], 1e-6)
                b = jnp.maximum(bias_ref[h], 1e-6)
                # log(p*(d+1)) + b == log(d+1) + log(p) + b   (p > 0)
                out_ref[...] = (log_ref[...] + (jnp.log(p) + b)).astype(out_ref.dtype)
            else:
                out_ref[...] = log_ref[...].astype(out_ref.dtype)

        elif scaler_type == "Poly":
            @pl.when(h == 0)
            def _():
                # TODO(synk): assumes distance >= 0 (true for distance matrices);
                # negative d with integer-valued p would differ from torch.pow.
                log_ref[...] = jnp.log(dist_ref[...].astype(jnp.float32))

            p = jnp.maximum(param_ref[h], 1e-6)
            b = jnp.maximum(bias_ref[h], 1e-6)
            # d**p + b == exp(p * log(d)) + b   (d == 0 -> exp(-inf) == 0, matches)
            out_ref[...] = (jnp.exp(p * log_ref[...]) + b).astype(out_ref.dtype)
        else:
            raise NotImplementedError(scaler_type)

    return kernel


@functools.partial(jax.jit, static_argnames=("scaler_type", "num_heads"))
def distance_scaler(distance, param, bias, *, scaler_type, num_heads):
    """Pallas implementation of DistanceScaler.forward.

    distance: [B, S, S] float32
    param, bias: [num_heads] float32
    returns: [B, num_heads, S, S] (or distance unchanged if scaler_type is None)
    """
    if scaler_type is None:
        return distance

    B, S1, S2 = distance.shape
    H = num_heads
    N = S1 * S2

    R = pl.cdiv(N, _LANES)          # number of 128-lane rows of real data
    R8 = _round_up(R, 8)
    TM = _pick_row_tile(R8)
    Rpad = _round_up(R8, TM)
    Npad = Rpad * _LANES

    d = distance.reshape(B, N)
    if Npad != N:
        # pad with 1.0: finite for every scaler (log(1) = 0); sliced off below
        d = jnp.pad(d, ((0, 0), (0, Npad - N)), constant_values=1.0)
    d = d.reshape(B, Rpad, _LANES)

    needs_scratch = scaler_type in ("Log", "Log_NON_LEARNABLE", "Poly")
    scratch_shapes = (
        [pltpu.VMEM((TM, _LANES), jnp.float32)] if needs_scratch else []
    )

    out = pl.pallas_call(
        _make_kernel(scaler_type),
        out_shape=jax.ShapeDtypeStruct((B, H, Rpad, _LANES), distance.dtype),
        grid=(B, Rpad // TM, H),
        in_specs=[
            # per-head scalars, whole [H] vector resident in SMEM (fetched once)
            pl.BlockSpec((H,), lambda b, r, h: (0,), memory_space=pltpu.SMEM),
            pl.BlockSpec((H,), lambda b, r, h: (0,), memory_space=pltpu.SMEM),
            # distance row-tile; index constant across h -> no re-DMA per head
            pl.BlockSpec((None, TM, _LANES), lambda b, r, h: (b, r, 0)),
        ],
        out_specs=pl.BlockSpec(
            (None, None, TM, _LANES), lambda b, r, h: (b, h, r, 0)
        ),
        scratch_shapes=scratch_shapes,
        compiler_params=pltpu.CompilerParams(
            dimension_semantics=("parallel", "parallel", "arbitrary"),
        ),
    )(param, bias, d)

    out = out.reshape(B, H, Npad)
    if Npad != N:
        out = out[:, :, :N]
    return out.reshape(B, H, S1, S2)


def _ref(distance, param, bias, scaler_type, num_heads):
    # pure-JAX reference mirroring the PyTorch forward
    if scaler_type is None:
        return distance
    d = jnp.stack([distance for _ in range(num_heads)], axis=1)
    p = jnp.maximum(param, 1e-6).reshape(1, num_heads, 1, 1)
    b = jnp.maximum(bias, 1e-6).reshape(1, num_heads, 1, 1)
    if scaler_type == "Linear":
        return p * d + b
    if scaler_type == "Log":
        return jnp.log(p * (d + 1.0)) + b
    if scaler_type == "Log_NON_LEARNABLE":
        return jnp.log(d + 1.0)
    if scaler_type == "Poly":
        return d ** p + b
    raise NotImplementedError(scaler_type)


if __name__ == "__main__":
    key = jax.random.PRNGKey(0)
    B, S, H = 2, 16, 4
    k1, k2 = jax.random.split(key, 2)
    distance = jax.random.uniform(k1, (B, S, S), dtype=jnp.float32)

    # module init: param = ones, bias = zeros
    param_init = jnp.ones((H,), dtype=jnp.float32)
    bias_init = jnp.zeros((H,), dtype=jnp.float32)
    # non-trivial parameterization (exercises the min=1e-6 clamps)
    param_rnd = jnp.array([0.5, 1.0, 2.0, -1.0], dtype=jnp.float32)
    bias_rnd = jnp.array([0.0, -0.5, 0.3, 1.0], dtype=jnp.float32)

    for (p, b) in ((param_init, bias_init), (param_rnd, bias_rnd)):
        for st in ("Linear", "Log", "Log_NON_LEARNABLE", "Poly"):
            out = distance_scaler(distance, p, b, scaler_type=st, num_heads=H)
            out = jax.block_until_ready(out)
            ref = _ref(distance, p, b, st, H)
            assert out.shape == (B, H, S, S), (st, out.shape)
            assert jnp.allclose(out, ref, atol=1e-5, rtol=1e-5), f"mismatch: {st}"

    # non-128-aligned flattened size exercises the lane-padding path
    S_odd = 10
    dist2 = jax.random.uniform(k2, (B, S_odd, S_odd), dtype=jnp.float32)
    out2 = jax.block_until_ready(
        distance_scaler(dist2, param_rnd, bias_rnd, scaler_type="Log", num_heads=H)
    )
    ref2 = _ref(dist2, param_rnd, bias_rnd, "Log", H)
    assert out2.shape == (B, H, S_odd, S_odd), out2.shape
    assert jnp.allclose(out2, ref2, atol=1e-5, rtol=1e-5), "mismatch: padded Log"

    # scaler_type=None passthrough (no kernel, per module semantics)
    out_none = jax.block_until_ready(
        distance_scaler(distance, param_init, bias_init, scaler_type=None, num_heads=H)
    )
    assert out_none.shape == (B, S, S)
    assert jnp.allclose(out_none, distance)

    print("KERNEL_OK")
</pallas_src>

<mosaic_0001>
module attributes {stable_mosaic.version = 11 : i64} {
  func.func @kernel(%arg0: i32, %arg1: i32, %arg2: i32, %arg3: memref<4xf32, #tpu.memory_space<smem>>, %arg4: memref<4xf32, #tpu.memory_space<smem>>, %arg5: memref<1x8x128xf32, #tpu.memory_space<vmem>>, %arg6: memref<1x1x8x128xf32, #tpu.memory_space<vmem>>) attributes {dimension_semantics = [#tpu.dimension_semantics<parallel>, #tpu.dimension_semantics<parallel>, #tpu.dimension_semantics<arbitrary>], iteration_bounds = array<i64: 2, 1, 4>, scalar_prefetch = 0 : i64, scratch_operands = 0 : i64, tpu.core_type = #tpu.core_type<tc>, window_params = [{transform_indices = @transform_0, window_bounds = array<i64: 4>}, {transform_indices = @transform_1, window_bounds = array<i64: 4>}, {transform_indices = @transform_2, window_bounds = array<i64: 1, 8, 128>}, {transform_indices = @transform_3, window_bounds = array<i64: 1, 1, 8, 128>}]} {
    %0 = arith.index_cast %arg2 : i32 to index
    %1 = memref.load %arg3[%0] : memref<4xf32, #tpu.memory_space<smem>>
    %cst = arith.constant 9.99999997E-7 : f32
    %2 = arith.maximumf %1, %cst : f32
    %3 = arith.index_cast %arg2 : i32 to index
    %4 = memref.load %arg4[%3] : memref<4xf32, #tpu.memory_space<smem>>
    %cst_0 = arith.constant 9.99999997E-7 : f32
    %5 = arith.maximumf %4, %cst_0 : f32
    %c0 = arith.constant 0 : index
    %c0_1 = arith.constant 0 : index
    %c0_2 = arith.constant 0 : index
    %6 = vector.load %arg5[%c0, %c0_1, %c0_2] : memref<1x8x128xf32, #tpu.memory_space<vmem>>, vector<1x8x128xf32>
    %7 = vector.shape_cast %6 : vector<1x8x128xf32> to vector<8x128xf32>
    %8 = vector.broadcast %2 : f32 to vector<8x128xf32>
    %9 = arith.mulf %8, %7 : vector<8x128xf32>
    %10 = vector.broadcast %5 : f32 to vector<8x128xf32>
    %11 = arith.addf %9, %10 : vector<8x128xf32>
    %c0_3 = arith.constant 0 : index
    %c0_4 = arith.constant 0 : index
    %c0_5 = arith.constant 0 : index
    %c0_6 = arith.constant 0 : index
    %12 = vector.load %arg6[%c0_3, %c0_4, %c0_5, %c0_6] : memref<1x1x8x128xf32, #tpu.memory_space<vmem>>, vector<1x1x8x128xf32>
    %13 = vector.shape_cast %12 : vector<1x1x8x128xf32> to vector<8x128xf32>
    %14 = vector.shape_cast %11 : vector<8x128xf32> to vector<1x1x8x128xf32>
    tpu.vector_store %arg6[%c0_3, %c0_4, %c0_5, %c0_6], %14 {strides = array<i32>} : memref<1x1x8x128xf32, #tpu.memory_space<vmem>>, vector<1x1x8x128xf32>,
    return
  }
  func.func @transform_0(%arg0: i32, %arg1: i32, %arg2: i32) -> i32 {
    %c0_i32 = arith.constant 0 : i32
    %c0_i32_0 = arith.constant 0 : i32
    return %c0_i32 : i32
  }
  func.func @transform_1(%arg0: i32, %arg1: i32, %arg2: i32) -> i32 {
    %c0_i32 = arith.constant 0 : i32
    %c0_i32_0 = arith.constant 0 : i32
    return %c0_i32 : i32
  }
  func.func @transform_2(%arg0: i32, %arg1: i32, %arg2: i32) -> (i32, i32, i32) {
    %c0_i32 = arith.constant 0 : i32
    %c0_i32_0 = arith.constant 0 : i32
    return %arg0, %arg1, %c0_i32 : i32, i32, i32
  }
  func.func @transform_3(%arg0: i32, %arg1: i32, %arg2: i32) -> (i32, i32, i32, i32) {
    %c0_i32 = arith.constant 0 : i32
    %c0_i32_0 = arith.constant 0 : i32
    return %arg0, %arg2, %arg1, %c0_i32 : i32, i32, i32, i32
  }
}

</mosaic_0001>

<llo_original>
// kernel: distance_scaler.1
$region0: #{distance_scaler.1}
  #allocation0 [shape = 'u32[]', space=smem, size = 0x4, offset = 0x4, fixed_abs, tag = 'smem constant byte address 0x4 - core index']
  #allocation1 [shape = 'u32[144,128]{1,0:T(1,128)}', space=vmem, size = 0x12000, scoped, tag = 'internal scratch']
  %s0 = inlined_call_operand.vmem [shape: f32[4], index: 0, kind: input, shape index: {}]
  %s1 = inlined_call_operand.vmem [shape: f32[4], index: 1, kind: input, shape index: {}]
  %s2 = inlined_call_operand.vmem [shape: f32[2,8,128], index: 2, kind: input, shape index: {}]
  %s3 = inlined_call_operand.vmem [shape: f32[2,4,8,128], index: 3, kind: output, shape index: {}]
  %s4 = sld [smem:[#allocation0]]
  $region53: #{distance_scaler.1} parent=0
    _
  %s6 = ssub.s32 1, %s4
  %s7 = scalar_select 0, %s6, %s4
  $region1: #{distance_scaler.1} parent=0
    #allocation2 [shape = 'u8[512]{0}', space=smem, size = 0x200, scoped, tag = 'input window, operand 0, single buffered']
    #allocation3 [shape = 's32[2]{0}', space=sflag, size = 0x8, scoped, tag = 'scoped memory for distance_scaler.1']
    #allocation4 [shape = 'u8[512]{0}', space=smem, size = 0x200, scoped, tag = 'input window, operand 1, single buffered']
    #allocation5 [shape = 's32[1]{0}', space=sflag, size = 0x4, scoped, tag = 'scoped memory for distance_scaler.1']
    %8 = vsyncpa [#allocation3], 0
    %9 = vsyncpa [#allocation5], 0
    loop: start=0, step=1, limit=10
    $region2: #{distance_scaler.1} parent=1 // loop_pre_header
      _
    $region3: #{distance_scaler.1} parent=1 // loop_header
      %s11 = sphi 0, %s15
      %p12 = scmp.ge.s32.totalorder %s11, 10
      %s18 = sphi 0, %s37
      %s19 = sphi 0, %s33
      %s20 = sphi 0, %s29
      %s21 = sphi 0, %s18
      %s22 = sphi 0, %s19
      %s23 = sphi 0, %s20
      %s24 = sphi 0, %s21
      %s25 = sphi 0, %s22
      %s26 = sphi 0, %s23
      %s38 = sphi 0, %s38
      %s40 = sphi 0, %s38
      %s41 = sphi 0, %s40
      %s55 = sphi 0, %s41
      %s59 = sphi 0, %s59
      %s61 = sphi 0, %s59
      %s62 = sphi 0, %s61
      %s76 = sphi 0, %s62
      %s84 = sphi 0, %s86
      %s87 = sphi 0, %s84
      %s88 = sphi 0, %s87
      %s104 = sphi 0, %s88
      %s114 = sphi 0, %s116
      %s117 = sphi 0, %s114
      %s118 = sphi 0, %s117
      %s134 = sphi 0, %s118
    $region4: #{distance_scaler.1} parent=1 // loop_header_branch
      %14 = sbr.rel (%p12) target = $region8
    $region5: #{distance_scaler.1} parent=1 // loop_body
      %s16 = ssub.s32 %s11, 1
      %s17 = ssub.s32 %s11, 2
      %s27 = sadd.s32 1, %s20
      %p28 = scmp.ge.s32.totalorder %s27, 4
      %s29 = scalar_select %p28, 0, %s27
      %s30 = sadd.s32 1, %s19
      %s31 = scalar_select %p28, %s30, %s19
      %p32 = scmp.ge.s32.totalorder %s31, 1
      %s33 = scalar_select %p32, 0, %s31
      %s34 = sadd.s32 1, %s18
      %s35 = scalar_select %p32, %s34, %s18
      %p36 = scmp.ge.s32.totalorder %s35, 2
      %s37 = scalar_select %p36, 0, %s35
      %s39 = sadd.s32 %s38, 1
      %p42 = scmp.eq.s32.totalorder %s11, 7
      %p43 = scmp.ne.s32.totalorder %s38, %s40
      %p44 = scmp.eq.s32.totalorder %s11, 0
      %p45 = por %p43, %p44
      %p46 = scmp.ne.s32.totalorder %s38, %s40
      %p47 = scmp.eq.s32.totalorder %s16, 7
      %p48 = por %p46, %p47
      %p49 = scmp.ne.s32.totalorder %s40, %s41
      %p50 = scmp.eq.s32.totalorder %s16, 0
      %p51 = por %p49, %p50
      %p52 = scmp.ne.s32.totalorder %s40, %s41
      %p53 = scmp.eq.s32.totalorder %s17, 7
      %p54 = por %p52, %p53
      %p56 = scmp.ne.s32.totalorder %s41, %s55
      %p57 = scmp.eq.s32.totalorder %s17, 0
      %p58 = por %p56, %p57
      %s60 = sadd.s32 %s59, 1
      %p63 = scmp.eq.s32.totalorder %s11, 7
      %p64 = scmp.ne.s32.totalorder %s59, %s61
      %p65 = scmp.eq.s32.totalorder %s11, 0
      %p66 = por %p64, %p65
      %p67 = scmp.ne.s32.totalorder %s59, %s61
      %p68 = scmp.eq.s32.totalorder %s16, 7
      %p69 = por %p67, %p68
      %p70 = scmp.ne.s32.totalorder %s61, %s62
      %p71 = scmp.eq.s32.totalorder %s16, 0
      %p72 = por %p70, %p71
      %p73 = scmp.ne.s32.totalorder %s61, %s62
      %p74 = scmp.eq.s32.totalorder %s17, 7
      %p75 = por %p73, %p74
      %p77 = scmp.ne.s32.totalorder %s62, %s76
      %p78 = scmp.eq.s32.totalorder %s17, 0
      %p79 = por %p77, %p78
      %s80 = ssub.s32 %s18, %s37
      %s81 = ssub.s32 %s19, %s33
      %s82 = sor.u32 %s80, %s81
      %p83 = scmp.eq.s32.totalorder %s82, 0
      %s85 = sadd.s32 %s84, 1
      %s86 = scalar_select %p83, %s84, %s85
      %p89 = pneg %p83
      %p90 = scmp.eq.s32.totalorder %s11, 7
      %p91 = por %p89, %p90
      %p92 = scmp.ne.s32.totalorder %s84, %s87
      %p93 = scmp.eq.s32.totalorder %s11, 0
      %p94 = por %p92, %p93
      %p95 = scmp.ne.s32.totalorder %s84, %s87
      %p96 = scmp.eq.s32.totalorder %s16, 7
      %p97 = por %p95, %p96
      %p98 = scmp.ne.s32.totalorder %s87, %s88
      %p99 = scmp.eq.s32.totalorder %s16, 0
      %p100 = por %p98, %p99
      %p101 = scmp.ne.s32.totalorder %s87, %s88
      %p102 = scmp.eq.s32.totalorder %s17, 7
      %p103 = por %p101, %p102
      %p105 = scmp.ne.s32.totalorder %s88, %s104
      %p106 = scmp.eq.s32.totalorder %s17, 0
      %p107 = por %p105, %p106
      %s108 = ssub.s32 %s18, %s37
      %s109 = ssub.s32 %s20, %s29
      %s110 = sor.u32 %s108, %s109
      %s111 = ssub.s32 %s19, %s33
      %s112 = sor.u32 %s110, %s111
      %p113 = scmp.eq.s32.totalorder %s112, 0
      %s115 = sadd.s32 %s114, 1
      %s116 = scalar_select %p113, %s114, %s115
      %p119 = pneg %p113
      %p120 = scmp.eq.s32.totalorder %s11, 7
      %p121 = por %p119, %p120
      %p122 = scmp.ne.s32.totalorder %s114, %s117
      %p123 = scmp.eq.s32.totalorder %s11, 0
      %p124 = por %p122, %p123
      %p125 = scmp.ne.s32.totalorder %s114, %s117
      %p126 = scmp.eq.s32.totalorder %s16, 7
      %p127 = por %p125, %p126
      %p128 = scmp.ne.s32.totalorder %s117, %s118
      %p129 = scmp.eq.s32.totalorder %s16, 0
      %p130 = por %p128, %p129
      %p131 = scmp.ne.s32.totalorder %s117, %s118
      %p132 = scmp.eq.s32.totalorder %s17, 7
      %p133 = por %p131, %p132
      %p135 = scmp.ne.s32.totalorder %s118, %s134
      %p136 = scmp.eq.s32.totalorder %s17, 0
      %p137 = por %p135, %p136
      %p138 = scmp.le.s32.totalorder 1, %s11
      %p139 = scmp.lt.s32.totalorder %s11, 9
      %p140 = pnand %p138, %p139
      %p141 = pneg %p140
      // Predicated region
      $region9: #{distance_scaler.1} parent=5 // pred_check
        _
      $region10: #{distance_scaler.1} parent=5 // pred_check_branch
        %143 = sbr.rel (%p140) target = $region12
      $region11: #{distance_scaler.1} parent=5 // pred_region
        %s144 = ssub.s32 %s11, 1
        // Predicated region
        $region13: #{distance_scaler.1} parent=11 // pred_check
          %p145 = pneg %p51
        $region14: #{distance_scaler.1} parent=11 // pred_check_branch
          %147 = sbr.rel (%p145) target = $region16
        $region15: #{distance_scaler.1} parent=11 // pred_region
          %s149 = ssub.s32 16, 16
          %150 = vsyncadd [#allocation3], %s149
          %s152 = sshll.u32 %s0, 4
          %s153 = int_to_ptr.vmem [resolvable:$true] %s152
          %155 = dma.vmem_to_smem %s153, 16, [#allocation2], [#allocation3]
        $region16: #{distance_scaler.1} parent=11 // pred_fallthru
          _
        // Predicated region
        $region17: #{distance_scaler.1} parent=11 // pred_check
          %p156 = pneg %p72
        $region18: #{distance_scaler.1} parent=11 // pred_check_branch
          %158 = sbr.rel (%p156) target = $region20
        $region19: #{distance_scaler.1} parent=11 // pred_region
          %s160 = ssub.s32 16, 16
          %161 = vsyncadd [#allocation5], %s160
          %s163 = sshll.u32 %s1, 4
          %s164 = int_to_ptr.vmem [resolvable:$true] %s163
          %166 = dma.vmem_to_smem %s164, 16, [#allocation4], [#allocation5]
        $region20: #{distance_scaler.1} parent=11 // pred_fallthru
          _
      $region12: #{distance_scaler.1} parent=5 // pred_fallthru
        _
      %p167 = scmp.lt.s32.totalorder %s11, 8
      // Predicated region
      $region21: #{distance_scaler.1} parent=5 // pred_check
        %p168 = pneg %p167
      $region22: #{distance_scaler.1} parent=5 // pred_check_branch
        %170 = sbr.rel (%p168) target = $region24
      $region23: #{distance_scaler.1} parent=5 // pred_region
        // Predicated region
        $region25: #{distance_scaler.1} parent=23 // pred_check
          %p171 = pneg %p94
        $region26: #{distance_scaler.1} parent=23 // pred_check_branch
          %173 = sbr.rel (%p171) target = $region28
        $region27: #{distance_scaler.1} parent=23 // pred_region
          %p174 = scmp.lt.s32.totalorder %s18, 1
          %s175 = scalar_select %p174, %s18, 1
          %p176 = scmp.lt.s32.totalorder %s19, 0
          %s177 = scalar_select %p176, %s19, 0
          %s178 = sadd.s32 %s177, %s175
          %s179 = smul.addr %s178, 8
          %s180 = scalar_lea.vmem %s2, %s179
        $region28: #{distance_scaler.1} parent=23 // pred_fallthru
          _
      $region24: #{distance_scaler.1} parent=5 // pred_fallthru
        _
      %p181 = scmp.le.s32.totalorder 1, %s11
      %p182 = scmp.lt.s32.totalorder %s11, 9
      %p183 = pnand %p181, %p182
      %p184 = pneg %p183
      // Predicated region
      $region29: #{distance_scaler.1} parent=5 // pred_check
        _
      $region30: #{distance_scaler.1} parent=5 // pred_check_branch
        %186 = sbr.rel (%p183) target = $region32
      $region31: #{distance_scaler.1} parent=5 // pred_region
        %s187 = ssub.s32 %s11, 1
        // Predicated region
        $region33: #{distance_scaler.1} parent=31 // pred_check
          %p188 = pneg %p51
        $region34: #{distance_scaler.1} parent=31 // pred_check_branch
          %190 = sbr.rel (%p188) target = $region36
        $region35: #{distance_scaler.1} parent=31 // pred_region
          %191 = dma.done [#allocation3], 16
        $region36: #{distance_scaler.1} parent=31 // pred_fallthru
          _
        // Predicated region
        $region37: #{distance_scaler.1} parent=31 // pred_check
          %p192 = pneg %p72
        $region38: #{distance_scaler.1} parent=31 // pred_check_branch
          %194 = sbr.rel (%p192) target = $region40
        $region39: #{distance_scaler.1} parent=31 // pred_region
          %195 = dma.done [#allocation5], 16
        $region40: #{distance_scaler.1} parent=31 // pred_fallthru
          _
        %196 = sfence
        %p197 = pneg %p51
        %p198 = pneg %p48
        %p199 = pneg %p72
        %p200 = pneg %p69
        %p201 = scmp.lt.s32.totalorder %s21, 1
        %s202 = scalar_select %p201, %s21, 1
        %p203 = scmp.lt.s32.totalorder %s22, 0
        %s204 = scalar_select %p203, %s22, 0
        %s205 = sadd.s32 %s204, %s202
        %s206 = smul.addr %s205, 8
        %s207 = scalar_lea.vmem %s2, %s206
        %p208 = pneg %p100
        %p209 = pneg %p97
        %p210 = pneg %p130
        %p211 = pneg %p127
        %p212 = scmp.lt.s32.totalorder %s21, 1
        %s213 = scalar_select %p212, %s21, 1
        %p214 = scmp.lt.s32.totalorder %s23, 3
        %s215 = scalar_select %p214, %s23, 3
        %p216 = scmp.lt.s32.totalorder %s22, 0
        %s217 = scalar_select %p216, %s22, 0
        %s218 = sadd.s32 %s217, %s215
        %s219 = smul.addr %s213, 4
        %s220 = sadd.s32 %s218, %s219
        %s221 = smul.addr %s220, 8
        %s222 = scalar_lea.vmem %s3, %s221
        %p223 = scmp.lt.s32.totalorder %s21, 1
        %s224 = scalar_select %p223, %s21, 1
        %p225 = scmp.lt.s32.totalorder %s22, 0
        %s226 = scalar_select %p225, %s22, 0
        %s227 = sadd.s32 %s226, %s224
        %s228 = smul.addr %s227, 8
        %s229 = scalar_lea.vmem %s2, %s228
        %p230 = scmp.lt.s32.totalorder %s21, 1
        %s231 = scalar_select %p230, %s21, 1
        %p232 = scmp.lt.s32.totalorder %s23, 3
        %s233 = scalar_select %p232, %s23, 3
        %p234 = scmp.lt.s32.totalorder %s22, 0
        %s235 = scalar_select %p234, %s22, 0
        %s236 = sadd.s32 %s235, %s233
        %s237 = smul.addr %s231, 4
        %s238 = sadd.s32 %s236, %s237
        %s239 = smul.addr %s238, 8
        %s240 = scalar_lea.vmem %s3, %s239
        %s241 = sld [smem:[#allocation2 + %s23]]
        %s242 = smax.f32 %s241, 1e-06
        %s243 = sld [smem:[#allocation4 + %s23]]
        %s244 = smax.f32 %s243, 1e-06
        %v245 = vld [vmem:[%s229] sm:$0xff]
        %v246 = vstv %s242
        %v247 = vmul.f32 %v246, %v245
        %v248 = vstv %s244
        %v249 = vadd.f32 %v247, %v248
        %250 = vst [vmem:[%s240] sm:$0xff] %v249
        %p251 = scmp.lt.s32.totalorder %s21, 1
        %s252 = scalar_select %p251, %s21, 1
        %p253 = scmp.lt.s32.totalorder %s23, 3
        %s254 = scalar_select %p253, %s23, 3
        %p255 = scmp.lt.s32.totalorder %s22, 0
        %s256 = scalar_select %p255, %s22, 0
        %s257 = sadd.s32 %s256, %s254
        %s258 = smul.addr %s252, 4
        %s259 = sadd.s32 %s257, %s258
        %s260 = smul.addr %s259, 8
        %s261 = scalar_lea.vmem %s3, %s260
        // Predicated region
        $region41: #{distance_scaler.1} parent=31 // pred_check
          %p262 = pneg %p127
        $region42: #{distance_scaler.1} parent=31 // pred_check_branch
          %264 = sbr.rel (%p262) target = $region44
        $region43: #{distance_scaler.1} parent=31 // pred_region
          _
        $region44: #{distance_scaler.1} parent=31 // pred_fallthru
          _
      $region32: #{distance_scaler.1} parent=5 // pred_fallthru
        _
      %p265 = scmp.le.s32.totalorder 2, %s11
      // Predicated region
      $region45: #{distance_scaler.1} parent=5 // pred_check
        %p266 = pneg %p265
      $region46: #{distance_scaler.1} parent=5 // pred_check_branch
        %268 = sbr.rel (%p266) target = $region48
      $region47: #{distance_scaler.1} parent=5 // pred_region
        %s269 = ssub.s32 %s11, 2
        // Predicated region
        $region49: #{distance_scaler.1} parent=47 // pred_check
          %p270 = pneg %p133
        $region50: #{distance_scaler.1} parent=47 // pred_check_branch
          %272 = sbr.rel (%p270) target = $region52
        $region51: #{distance_scaler.1} parent=47 // pred_region
          %p273 = scmp.lt.s32.totalorder %s24, 1
          %s274 = scalar_select %p273, %s24, 1
          %p275 = scmp.lt.s32.totalorder %s26, 3
          %s276 = scalar_select %p275, %s26, 3
          %p277 = scmp.lt.s32.totalorder %s25, 0
          %s278 = scalar_select %p277, %s25, 0
          %s279 = sadd.s32 %s278, %s276
          %s280 = smul.addr %s274, 4
          %s281 = sadd.s32 %s279, %s280
          %s282 = smul.addr %s281, 8
          %s283 = scalar_lea.vmem %s3, %s282
        $region52: #{distance_scaler.1} parent=47 // pred_fallthru
          _
      $region48: #{distance_scaler.1} parent=5 // pred_fallthru
        _
    $region6: #{distance_scaler.1} parent=1 // loop_footer
      %s15 = sadd.s32 1, %s11
    $region7: #{distance_scaler.1} parent=1 // loop_footer_branch
      %10 = sbr.rel target = $region3
    $region8: #{distance_scaler.1} parent=1 // loop_exit
      _
    %284 = vsyncpa [#allocation3], 1
    %s285 = scalar_lea.sflag [#allocation3], 1
    %286 = vsyncpa %s285, 1
    %287 = vsyncpa [#allocation5], 1

</llo_original>
